<compile_context>
chip_gen: v7x
topology: tpu7x:2x2x1
jax: 0.10.0
libtpu: 0.0.40
codegen_flags: <defaults>
</compile_context>

<pallas_src>
import functools

import jax
import jax.numpy as jnp
from jax import lax
from jax.experimental import pallas as pl
from jax.experimental.pallas import tpu as pltpu


def _round_up(x, m):
    return ((x + m - 1) // m) * m


# ----------------------------------------------------------------------------
# Pallas kernel: fused FCResNet forward for one batch tile.
# ----------------------------------------------------------------------------
def _fcresnet_kernel(x_ref, w0_ref, b0_ref, wres_ref, bres_ref, wl_ref, bl_ref,
                     o_ref, *, depth):
    # first linear: (TB, Din)bf16 @ (Din, F)bf16 -> f32 acc, + (1, F)f32 bias
    h = jnp.dot(x_ref[...], w0_ref[...],
                preferred_element_type=jnp.float32) + b0_ref[...]

    # residual blocks: h = h + relu(h @ W_d + b_d)   (dropout = identity, eval)
    def block(d, h):
        y = jnp.dot(h.astype(jnp.bfloat16), wres_ref[d],
                    preferred_element_type=jnp.float32) + bres_ref[d]
        return h + jnp.maximum(y, 0.0)

    if depth <= 8:
        # unroll at trace time: straight-line code lets the LLO scheduler
        # overlap layer d+1's VMEM weight loads with layer d's MXU drain /
        # VPU relu+residual work.  Live state at tb=128/F=128 is ~40 vregs.
        for d in range(depth):
            h = block(d, h)
    else:
        # very deep stacks: partially-unrolled visible loop bounds code size
        # while still giving some scheduling window.
        h = lax.fori_loop(0, depth, block, h, unroll=4)

    # last linear: (TB, F)bf16 @ (F, nout)bf16 -> f32 acc, + (1, nout)f32 bias
    out = jnp.dot(h.astype(jnp.bfloat16), wl_ref[...],
                  preferred_element_type=jnp.float32) + bl_ref[...]
    o_ref[...] = out.astype(o_ref.dtype)


# ----------------------------------------------------------------------------
# One-time parameter preparation (NOT on the per-call hot path).
# ----------------------------------------------------------------------------
def prepare_fcresnet_params(params):
    """Cast matmul operands to bf16 once; biases stay f32.  Inputs are the
    pre-transposed (in, out) f32 params from make_fcresnet_params."""
    return {
        "w0": params["w0"].astype(jnp.bfloat16),      # (Din, F)
        "b0": params["b0"].astype(jnp.float32),       # (1, F)
        "wres": params["wres"].astype(jnp.bfloat16),  # (depth, F, F)
        "bres": params["bres"].astype(jnp.float32),   # (depth, 1, F)
        "wl": params["wl"].astype(jnp.bfloat16),      # (F, nout)
        "bl": params["bl"].astype(jnp.float32),       # (1, nout)
    }


def fcresnet_forward(x, prep, *, tb=128):
    """x: (B, input_dim) float32.  prep: output of prepare_fcresnet_params.
    Returns (B, num_outputs) float32."""
    B, Din = x.shape
    F = prep["w0"].shape[1]
    depth = prep["wres"].shape[0]
    nout = prep["wl"].shape[1]

    # --- hot-path input prep only: bf16 cast of x + batch padding ------------
    xb = x.astype(jnp.bfloat16)
    # bf16 packs 16 rows per sublane-packed vreg -> round the M tile to 16.
    tb_eff = min(tb, _round_up(B, 16))
    Bp = _round_up(B, tb_eff)
    if Bp != B:
        xb = jnp.zeros((Bp, Din), jnp.bfloat16).at[:B].set(xb)
    grid = (Bp // tb_eff,)

    # --- VMEM budget (weights single-buffered) / cost hints -------------------
    weight_bytes = ((prep["w0"].size + prep["wres"].size + prep["wl"].size) * 2
                    + (prep["b0"].size + prep["bres"].size + prep["bl"].size) * 4)
    act_bytes = 2 * (tb_eff * Din * 2) + 2 * (tb_eff * nout * 4)  # dbl-buffered
    vmem_need = weight_bytes + act_bytes + (4 << 20)
    try:
        vmem_cap = int(pltpu.get_tpu_info().vmem_capacity_bytes)
    except Exception:
        vmem_cap = 64 * 1024 * 1024      # conservative (v7x per-TC capacity)
    # Always pass a limit: at least 32 MiB (>= any generation's default scoped
    # limit, incl. v5e's 16 MiB), never above physical capacity minus headroom.
    vmem_limit = int(min(max(vmem_need, 32 << 20), vmem_cap - (8 << 20)))

    flops = 2 * Bp * (Din * F + depth * F * F + F * nout)
    bytes_accessed = int(xb.size * 2 + weight_bytes + Bp * nout * 4)
    cost = pl.CostEstimate(flops=int(flops), transcendentals=0,
                           bytes_accessed=bytes_accessed)

    # Constant-index weight/bias blocks: single-buffer them (no refetch needed).
    sb = pl.Buffered(1)

    kernel = functools.partial(_fcresnet_kernel, depth=depth)
    out = pl.pallas_call(
        kernel,
        out_shape=jax.ShapeDtypeStruct((Bp, nout), jnp.float32),
        grid_spec=pltpu.PrefetchScalarGridSpec(
            num_scalar_prefetch=0,
            grid=grid,
            in_specs=[
                pl.BlockSpec((tb_eff, Din), lambda i: (i, 0)),          # x tile
                pl.BlockSpec((Din, F), lambda i: (0, 0),
                             pipeline_mode=sb),                         # W_first^T
                pl.BlockSpec((1, F), lambda i: (0, 0),
                             pipeline_mode=sb),                         # b_first
                pl.BlockSpec((depth, F, F), lambda i: (0, 0, 0),
                             pipeline_mode=sb),                         # W_res^T
                pl.BlockSpec((depth, 1, F), lambda i: (0, 0, 0),
                             pipeline_mode=sb),                         # b_res
                pl.BlockSpec((F, nout), lambda i: (0, 0),
                             pipeline_mode=sb),                         # W_last^T
                pl.BlockSpec((1, nout), lambda i: (0, 0),
                             pipeline_mode=sb),                         # b_last
            ],
            out_specs=pl.BlockSpec((tb_eff, nout), lambda i: (i, 0)),
        ),
        compiler_params=pltpu.CompilerParams(
            dimension_semantics=("parallel",),
            vmem_limit_bytes=vmem_limit),
        cost_estimate=cost,
    )(xb, prep["w0"], prep["b0"], prep["wres"], prep["bres"],
      prep["wl"], prep["bl"])

    return out if Bp == B else out[:B]


# ----------------------------------------------------------------------------
# Parameter setup glue (plain JAX): init + spectral_norm_fc semantics.
# ----------------------------------------------------------------------------
def _l2_normalize(v, eps=1e-12):
    return v / jnp.maximum(jnp.linalg.norm(v), eps)


def spectral_norm_fc_weight(w, u0, v0, coeff, n_power_iterations=1, eps=1e-12):
    """w: (out, in). Reproduces SpectralNormFC.compute_weight with
    do_power_iteration=True: power-iteration on (u, v), then
    w / max(1, sigma / coeff)."""
    u, v = u0, v0
    for _ in range(n_power_iterations):
        v = _l2_normalize(w.T @ u, eps)
        u = _l2_normalize(w @ v, eps)
    sigma = u @ (w @ v)
    factor = jnp.maximum(jnp.float32(1.0), sigma / coeff)
    return w / factor


def linear_init(key, fan_out, fan_in):
    """PyTorch nn.Linear default init: U(-k, k), k = 1/sqrt(fan_in)."""
    kw, kb = jax.random.split(key)
    bound = 1.0 / jnp.sqrt(jnp.float32(fan_in))
    w = jax.random.uniform(kw, (fan_out, fan_in), jnp.float32, -bound, bound)
    b = jax.random.uniform(kb, (fan_out,), jnp.float32, -bound, bound)
    return w, b


def make_fcresnet_params(key, input_dim, features, depth, num_outputs,
                         spectral_normalization=True, coeff=0.95,
                         n_power_iterations=1):
    keys = jax.random.split(key, depth + 2)

    def sn(w, k):
        if not spectral_normalization:
            return w
        ku, kv = jax.random.split(k)
        u = _l2_normalize(jax.random.normal(ku, (w.shape[0],), jnp.float32))
        v = _l2_normalize(jax.random.normal(kv, (w.shape[1],), jnp.float32))
        return spectral_norm_fc_weight(w, u, v, coeff, n_power_iterations)

    # first: Linear(input_dim -> features), spectral-normalized
    w0, b0 = linear_init(keys[0], features, input_dim)
    w0 = sn(w0, jax.random.fold_in(keys[0], 7))

    # residuals: depth x Linear(features -> features), spectral-normalized
    wres, bres = [], []
    for d in range(depth):
        w, b = linear_init(keys[1 + d], features, features)
        w = sn(w, jax.random.fold_in(keys[1 + d], 7))
        wres.append(w)
        bres.append(b)
    wres = jnp.stack(wres)              # (depth, F, F)  (out, in)
    bres = jnp.stack(bres)              # (depth, F)

    # last: Linear(features -> num_outputs), NOT spectral-normalized
    wl, bl = linear_init(keys[-1], num_outputs, features)

    # pre-transpose for the kernel: (in, out)
    return {
        "w0": w0.T,                                   # (Din, F)
        "b0": b0.reshape(1, features),                # (1, F)
        "wres": jnp.transpose(wres, (0, 2, 1)),       # (depth, F, F) as (in,out)
        "bres": bres.reshape(depth, 1, features),     # (depth, 1, F)
        "wl": wl.T,                                   # (F, num_outputs)
        "bl": bl.reshape(1, num_outputs),             # (1, num_outputs)
    }


def fcresnet_ref(x, params):
    """Pure-JAX reference mirroring the kernel's bf16-matmul / f32-accumulate
    numerics (weights cast to bf16 exactly like prepare_fcresnet_params)."""
    xb = x.astype(jnp.bfloat16)
    w0 = params["w0"].astype(jnp.bfloat16)
    wres = params["wres"].astype(jnp.bfloat16)
    wl = params["wl"].astype(jnp.bfloat16)
    h = jnp.dot(xb, w0, preferred_element_type=jnp.float32) + params["b0"]
    for d in range(params["wres"].shape[0]):
        y = jnp.dot(h.astype(jnp.bfloat16), wres[d],
                    preferred_element_type=jnp.float32) + params["bres"][d]
        h = h + jnp.maximum(y, 0.0)
    return jnp.dot(h.astype(jnp.bfloat16), wl,
                   preferred_element_type=jnp.float32) + params["bl"]


# ----------------------------------------------------------------------------
if __name__ == "__main__":
    key = jax.random.PRNGKey(0)
    kx, kp = jax.random.split(key)

    # shapes consistent with FCResNet(input_dim=16, features=128, depth=3,
    # spectral_normalization=True, num_outputs=8); batch 256 -> 2 grid steps
    # of 128 rows each (keeps both v7x TensorCores busy, fills the MXU M dim).
    B, INPUT_DIM, FEATURES, DEPTH, NUM_OUTPUTS = 256, 16, 128, 3, 8

    x = jax.random.normal(kx, (B, INPUT_DIM), jnp.float32)
    params = make_fcresnet_params(kp, INPUT_DIM, FEATURES, DEPTH, NUM_OUTPUTS,
                                  spectral_normalization=True, coeff=0.95,
                                  n_power_iterations=1)
    prep = prepare_fcresnet_params(params)   # one-time; not on the hot path

    out = fcresnet_forward(x, prep, tb=128)
    out = jax.block_until_ready(out)

    ref = fcresnet_ref(x, params)
    assert out.shape == (B, NUM_OUTPUTS)
    # bf16 rounding compounds across the residual chain -> depth-scaled tol.
    tol = 2e-3 * max(1.0, DEPTH / 3.0)
    assert jnp.allclose(out, ref, atol=tol, rtol=tol), "mismatch vs reference"

    print("KERNEL_OK")
</pallas_src>

<mosaic_0001>
module attributes {stable_mosaic.version = 11 : i64} {
  func.func @_fcresnet_kernel(%arg0: i32, %arg1: memref<128x16xbf16, #tpu.memory_space<vmem>>, %arg2: memref<16x128xbf16, #tpu.memory_space<vmem>>, %arg3: memref<1x128xf32, #tpu.memory_space<vmem>>, %arg4: memref<3x128x128xbf16, #tpu.memory_space<vmem>>, %arg5: memref<3x1x128xf32, #tpu.memory_space<vmem>>, %arg6: memref<128x8xbf16, #tpu.memory_space<vmem>>, %arg7: memref<1x8xf32, #tpu.memory_space<vmem>>, %arg8: memref<128x8xf32, #tpu.memory_space<vmem>>) attributes {dimension_semantics = [#tpu.dimension_semantics<parallel>], iteration_bounds = array<i64: 2>, scalar_prefetch = 0 : i64, scratch_operands = 0 : i64, tpu.core_type = #tpu.core_type<tc>, window_params = [{transform_indices = @transform_0, window_bounds = array<i64: 128, 16>}, {pipeline_mode = #tpu.pipeline_mode<synchronous>, transform_indices = @transform_1, window_bounds = array<i64: 16, 128>}, {pipeline_mode = #tpu.pipeline_mode<synchronous>, transform_indices = @transform_2, window_bounds = array<i64: 1, 128>}, {pipeline_mode = #tpu.pipeline_mode<synchronous>, transform_indices = @transform_3, window_bounds = array<i64: 3, 128, 128>}, {pipeline_mode = #tpu.pipeline_mode<synchronous>, transform_indices = @transform_4, window_bounds = array<i64: 3, 1, 128>}, {pipeline_mode = #tpu.pipeline_mode<synchronous>, transform_indices = @transform_5, window_bounds = array<i64: 128, 8>}, {pipeline_mode = #tpu.pipeline_mode<synchronous>, transform_indices = @transform_6, window_bounds = array<i64: 1, 8>}, {transform_indices = @transform_7, window_bounds = array<i64: 128, 8>}]} {
    %c0 = arith.constant 0 : index
    %c0_0 = arith.constant 0 : index
    %0 = vector.load %arg1[%c0, %c0_0] : memref<128x16xbf16, #tpu.memory_space<vmem>>, vector<128x16xbf16>
    %c0_1 = arith.constant 0 : index
    %c0_2 = arith.constant 0 : index
    %1 = vector.load %arg2[%c0_1, %c0_2] : memref<16x128xbf16, #tpu.memory_space<vmem>>, vector<16x128xbf16>
    %cst = arith.constant dense<0.000000e+00> : vector<128x128xf32>
    %2 = tpu.matmul %0, %1, %cst {dimension_numbers = #tpu.dot_dimension_numbers<[1], [0], [0], [1], [0, 0, 1, 1], [], []>} : vector<128x16xbf16>, vector<16x128xbf16>, vector<128x128xf32> -> vector<128x128xf32>
    %c0_3 = arith.constant 0 : index
    %c0_4 = arith.constant 0 : index
    %3 = vector.load %arg3[%c0_3, %c0_4] : memref<1x128xf32, #tpu.memory_space<vmem>>, vector<1x128xf32>
    %4 = vector.broadcast %3 : vector<1x128xf32> to vector<128x128xf32>
    %5 = arith.addf %2, %4 : vector<128x128xf32>
    %6 = arith.truncf %5 : vector<128x128xf32> to vector<128x128xbf16>
    %c0_5 = arith.constant 0 : index
    %c0_6 = arith.constant 0 : index
    %c0_7 = arith.constant 0 : index
    %7 = vector.load %arg4[%c0_5, %c0_6, %c0_7] : memref<3x128x128xbf16, #tpu.memory_space<vmem>>, vector<1x128x128xbf16>
    %8 = vector.shape_cast %7 : vector<1x128x128xbf16> to vector<128x128xbf16>
    %cst_8 = arith.constant dense<0.000000e+00> : vector<128x128xf32>
    %9 = tpu.matmul %6, %8, %cst_8 {dimension_numbers = #tpu.dot_dimension_numbers<[1], [0], [0], [1], [0, 0, 1, 1], [], []>} : vector<128x128xbf16>, vector<128x128xbf16>, vector<128x128xf32> -> vector<128x128xf32>
    %c0_9 = arith.constant 0 : index
    %c0_10 = arith.constant 0 : index
    %c0_11 = arith.constant 0 : index
    %10 = vector.load %arg5[%c0_9, %c0_10, %c0_11] : memref<3x1x128xf32, #tpu.memory_space<vmem>>, vector<1x1x128xf32>
    %11 = vector.shape_cast %10 : vector<1x1x128xf32> to vector<1x128xf32>
    %12 = vector.broadcast %11 : vector<1x128xf32> to vector<128x128xf32>
    %13 = arith.addf %9, %12 : vector<128x128xf32>
    %cst_12 = arith.constant 0.000000e+00 : f32
    %14 = vector.broadcast %cst_12 : f32 to vector<128x128xf32>
    %15 = arith.maximumf %13, %14 : vector<128x128xf32>
    %16 = arith.addf %5, %15 : vector<128x128xf32>
    %17 = arith.truncf %16 : vector<128x128xf32> to vector<128x128xbf16>
    %c1 = arith.constant 1 : index
    %c0_13 = arith.constant 0 : index
    %c0_14 = arith.constant 0 : index
    %18 = vector.load %arg4[%c1, %c0_13, %c0_14] : memref<3x128x128xbf16, #tpu.memory_space<vmem>>, vector<1x128x128xbf16>
    %19 = vector.shape_cast %18 : vector<1x128x128xbf16> to vector<128x128xbf16>
    %cst_15 = arith.constant dense<0.000000e+00> : vector<128x128xf32>
    %20 = tpu.matmul %17, %19, %cst_15 {dimension_numbers = #tpu.dot_dimension_numbers<[1], [0], [0], [1], [0, 0, 1, 1], [], []>} : vector<128x128xbf16>, vector<128x128xbf16>, vector<128x128xf32> -> vector<128x128xf32>
    %c1_16 = arith.constant 1 : index
    %c0_17 = arith.constant 0 : index
    %c0_18 = arith.constant 0 : index
    %21 = vector.load %arg5[%c1_16, %c0_17, %c0_18] : memref<3x1x128xf32, #tpu.memory_space<vmem>>, vector<1x1x128xf32>
    %22 = vector.shape_cast %21 : vector<1x1x128xf32> to vector<1x128xf32>
    %23 = vector.broadcast %22 : vector<1x128xf32> to vector<128x128xf32>
    %24 = arith.addf %20, %23 : vector<128x128xf32>
    %cst_19 = arith.constant 0.000000e+00 : f32
    %25 = vector.broadcast %cst_19 : f32 to vector<128x128xf32>
    %26 = arith.maximumf %24, %25 : vector<128x128xf32>
    %27 = arith.addf %16, %26 : vector<128x128xf32>
    %28 = arith.truncf %27 : vector<128x128xf32> to vector<128x128xbf16>
    %c2 = arith.constant 2 : index
    %c0_20 = arith.constant 0 : index
    %c0_21 = arith.constant 0 : index
    %29 = vector.load %arg4[%c2, %c0_20, %c0_21] : memref<3x128x128xbf16, #tpu.memory_space<vmem>>, vector<1x128x128xbf16>
    %30 = vector.shape_cast %29 : vector<1x128x128xbf16> to vector<128x128xbf16>
    %cst_22 = arith.constant dense<0.000000e+00> : vector<128x128xf32>
    %31 = tpu.matmul %28, %30, %cst_22 {dimension_numbers = #tpu.dot_dimension_numbers<[1], [0], [0], [1], [0, 0, 1, 1], [], []>} : vector<128x128xbf16>, vector<128x128xbf16>, vector<128x128xf32> -> vector<128x128xf32>
    %c2_23 = arith.constant 2 : index
    %c0_24 = arith.constant 0 : index
    %c0_25 = arith.constant 0 : index
    %32 = vector.load %arg5[%c2_23, %c0_24, %c0_25] : memref<3x1x128xf32, #tpu.memory_space<vmem>>, vector<1x1x128xf32>
    %33 = vector.shape_cast %32 : vector<1x1x128xf32> to vector<1x128xf32>
    %34 = vector.broadcast %33 : vector<1x128xf32> to vector<128x128xf32>
    %35 = arith.addf %31, %34 : vector<128x128xf32>
    %cst_26 = arith.constant 0.000000e+00 : f32
    %36 = vector.broadcast %cst_26 : f32 to vector<128x128xf32>
    %37 = arith.maximumf %35, %36 : vector<128x128xf32>
    %38 = arith.addf %27, %37 : vector<128x128xf32>
    %39 = arith.truncf %38 : vector<128x128xf32> to vector<128x128xbf16>
    %c0_27 = arith.constant 0 : index
    %c0_28 = arith.constant 0 : index
    %40 = vector.load %arg6[%c0_27, %c0_28] : memref<128x8xbf16, #tpu.memory_space<vmem>>, vector<128x8xbf16>
    %cst_29 = arith.constant dense<0.000000e+00> : vector<128x8xf32>
    %41 = tpu.matmul %39, %40, %cst_29 {dimension_numbers = #tpu.dot_dimension_numbers<[1], [0], [0], [1], [0, 0, 1, 1], [], []>} : vector<128x128xbf16>, vector<128x8xbf16>, vector<128x8xf32> -> vector<128x8xf32>
    %c0_30 = arith.constant 0 : index
    %c0_31 = arith.constant 0 : index
    %42 = vector.load %arg7[%c0_30, %c0_31] : memref<1x8xf32, #tpu.memory_space<vmem>>, vector<1x8xf32>
    %43 = vector.broadcast %42 : vector<1x8xf32> to vector<128x8xf32>
    %44 = arith.addf %41, %43 : vector<128x8xf32>
    %c0_32 = arith.constant 0 : index
    %c0_33 = arith.constant 0 : index
    %45 = vector.load %arg8[%c0_32, %c0_33] : memref<128x8xf32, #tpu.memory_space<vmem>>, vector<128x8xf32>
    tpu.vector_store %arg8[%c0_32, %c0_33], %44 {strides = array<i32>} : memref<128x8xf32, #tpu.memory_space<vmem>>, vector<128x8xf32>,
    return
  }
  func.func @transform_0(%arg0: i32) -> (i32, i32) {
    %c0_i32 = arith.constant 0 : i32
    %c0_i32_0 = arith.constant 0 : i32
    return %arg0, %c0_i32 : i32, i32
  }
  func.func @transform_1(%arg0: i32) -> (i32, i32) {
    %c0_i32 = arith.constant 0 : i32
    %c0_i32_0 = arith.constant 0 : i32
    %c0_i32_1 = arith.constant 0 : i32
    return %c0_i32, %c0_i32_0 : i32, i32
  }
  func.func @transform_2(%arg0: i32) -> (i32, i32) {
    %c0_i32 = arith.constant 0 : i32
    %c0_i32_0 = arith.constant 0 : i32
    %c0_i32_1 = arith.constant 0 : i32
    return %c0_i32, %c0_i32_0 : i32, i32
  }
  func.func @transform_3(%arg0: i32) -> (i32, i32, i32) {
    %c0_i32 = arith.constant 0 : i32
    %c0_i32_0 = arith.constant 0 : i32
    %c0_i32_1 = arith.constant 0 : i32
    %c0_i32_2 = arith.constant 0 : i32
    return %c0_i32, %c0_i32_0, %c0_i32_1 : i32, i32, i32
  }
  func.func @transform_4(%arg0: i32) -> (i32, i32, i32) {
    %c0_i32 = arith.constant 0 : i32
    %c0_i32_0 = arith.constant 0 : i32
    %c0_i32_1 = arith.constant 0 : i32
    %c0_i32_2 = arith.constant 0 : i32
    return %c0_i32, %c0_i32_0, %c0_i32_1 : i32, i32, i32
  }
  func.func @transform_5(%arg0: i32) -> (i32, i32) {
    %c0_i32 = arith.constant 0 : i32
    %c0_i32_0 = arith.constant 0 : i32
    %c0_i32_1 = arith.constant 0 : i32
    return %c0_i32, %c0_i32_0 : i32, i32
  }
  func.func @transform_6(%arg0: i32) -> (i32, i32) {
    %c0_i32 = arith.constant 0 : i32
    %c0_i32_0 = arith.constant 0 : i32
    %c0_i32_1 = arith.constant 0 : i32
    return %c0_i32, %c0_i32_0 : i32, i32
  }
  func.func @transform_7(%arg0: i32) -> (i32, i32) {
    %c0_i32 = arith.constant 0 : i32
    %c0_i32_0 = arith.constant 0 : i32
    return %arg0, %c0_i32 : i32, i32
  }
}

</mosaic_0001>

<llo_original>
// kernel: tpu_custom_call.1
$region0: #{tpu_custom_call.1}
  #allocation0 [shape = 'u32[]', space=smem, size = 0x4, offset = 0x4, fixed_abs, tag = 'smem constant byte address 0x4 - core index']
  #allocation1 [shape = 'u32[144,128]{1,0:T(1,128)}', space=vmem, size = 0x12000, scoped, tag = 'internal scratch']
  %s0 = inlined_call_operand.vmem [shape: bf16[256,16], index: 0, kind: input, shape index: {}]
  %s1 = inlined_call_operand.vmem [shape: bf16[16,128], index: 1, kind: input, shape index: {}]
  %s2 = inlined_call_operand.vmem [shape: f32[1,128], index: 2, kind: input, shape index: {}]
  %s3 = inlined_call_operand.vmem [shape: bf16[3,128,128], index: 3, kind: input, shape index: {}]
  %s4 = inlined_call_operand.vmem [shape: f32[3,1,128], index: 4, kind: input, shape index: {}]
  %s5 = inlined_call_operand.vmem [shape: bf16[128,8], index: 5, kind: input, shape index: {}]
  %s6 = inlined_call_operand.vmem [shape: f32[1,8], index: 6, kind: input, shape index: {}]
  %s7 = inlined_call_operand.vmem [shape: f32[256,8], index: 7, kind: output, shape index: {}]
  %s8 = sld [smem:[#allocation0]]
  $region61: #{tpu_custom_call.1} parent=0
    _
  %s10 = ssub.s32 1, %s8
  %s11 = scalar_select 0, %s10, %s8
  loop: start=0, step=1, limit=4
  $region2: #{tpu_custom_call.1} parent=0 // loop_pre_header
    _
  $region3: #{tpu_custom_call.1} parent=0 // loop_header
    %s13 = sphi 0, %s17
    %p14 = scmp.ge.s32.totalorder %s13, 4
    %s23 = sphi 0, %s25
    %s26 = sphi 0, %s23
    %s27 = sphi 0, %s26
    %s43 = sphi 0, %s27
    %s47 = sphi 0, %s47
    %s49 = sphi 0, %s47
    %s50 = sphi 0, %s49
    %s64 = sphi 0, %s50
    %s68 = sphi 0, %s68
    %s70 = sphi 0, %s68
    %s71 = sphi 0, %s70
    %s85 = sphi 0, %s71
    %s89 = sphi 0, %s89
    %s91 = sphi 0, %s89
    %s92 = sphi 0, %s91
    %s106 = sphi 0, %s92
    %s110 = sphi 0, %s110
    %s112 = sphi 0, %s110
    %s113 = sphi 0, %s112
    %s127 = sphi 0, %s113
    %s131 = sphi 0, %s131
    %s133 = sphi 0, %s131
    %s134 = sphi 0, %s133
    %s148 = sphi 0, %s134
    %s152 = sphi 0, %s152
    %s154 = sphi 0, %s152
    %s155 = sphi 0, %s154
    %s169 = sphi 0, %s155
    %s175 = sphi 0, %s177
    %s178 = sphi 0, %s175
    %s179 = sphi 0, %s178
    %s195 = sphi 0, %s179
  $region4: #{tpu_custom_call.1} parent=0 // loop_header_branch
    %16 = sbr.rel (%p14) target = $region8
  $region5: #{tpu_custom_call.1} parent=0 // loop_body
    %s18 = ssub.s32 %s13, 1
    %s19 = ssub.s32 %s13, 2
    %s20 = sadd.s32 %s13, 1
    %s21 = ssub.s32 %s13, %s20
    %p22 = scmp.eq.s32.totalorder %s21, 0
    %s24 = sadd.s32 %s23, 1
    %s25 = scalar_select %p22, %s23, %s24
    %p28 = pneg %p22
    %p29 = scmp.eq.s32.totalorder %s13, 1
    %p30 = por %p28, %p29
    %p31 = scmp.ne.s32.totalorder %s23, %s26
    %p32 = scmp.eq.s32.totalorder %s13, 0
    %p33 = por %p31, %p32
    %p34 = scmp.ne.s32.totalorder %s23, %s26
    %p35 = scmp.eq.s32.totalorder %s18, 1
    %p36 = por %p34, %p35
    %p37 = scmp.ne.s32.totalorder %s26, %s27
    %p38 = scmp.eq.s32.totalorder %s18, 0
    %p39 = por %p37, %p38
    %p40 = scmp.ne.s32.totalorder %s26, %s27
    %p41 = scmp.eq.s32.totalorder %s19, 1
    %p42 = por %p40, %p41
    %p44 = scmp.ne.s32.totalorder %s27, %s43
    %p45 = scmp.eq.s32.totalorder %s19, 0
    %p46 = por %p44, %p45
    %s48 = sadd.s32 %s47, 1
    %p51 = scmp.eq.s32.totalorder %s13, 1
    %p52 = scmp.ne.s32.totalorder %s47, %s49
    %p53 = scmp.eq.s32.totalorder %s13, 0
    %p54 = por %p52, %p53
    %p55 = scmp.ne.s32.totalorder %s47, %s49
    %p56 = scmp.eq.s32.totalorder %s18, 1
    %p57 = por %p55, %p56
    %p58 = scmp.ne.s32.totalorder %s49, %s50
    %p59 = scmp.eq.s32.totalorder %s18, 0
    %p60 = por %p58, %p59
    %p61 = scmp.ne.s32.totalorder %s49, %s50
    %p62 = scmp.eq.s32.totalorder %s19, 1
    %p63 = por %p61, %p62
    %p65 = scmp.ne.s32.totalorder %s50, %s64
    %p66 = scmp.eq.s32.totalorder %s19, 0
    %p67 = por %p65, %p66
    %s69 = sadd.s32 %s68, 1
    %p72 = scmp.eq.s32.totalorder %s13, 1
    %p73 = scmp.ne.s32.totalorder %s68, %s70
    %p74 = scmp.eq.s32.totalorder %s13, 0
    %p75 = por %p73, %p74
    %p76 = scmp.ne.s32.totalorder %s68, %s70
    %p77 = scmp.eq.s32.totalorder %s18, 1
    %p78 = por %p76, %p77
    %p79 = scmp.ne.s32.totalorder %s70, %s71
    %p80 = scmp.eq.s32.totalorder %s18, 0
    %p81 = por %p79, %p80
    %p82 = scmp.ne.s32.totalorder %s70, %s71
    %p83 = scmp.eq.s32.totalorder %s19, 1
    %p84 = por %p82, %p83
    %p86 = scmp.ne.s32.totalorder %s71, %s85
    %p87 = scmp.eq.s32.totalorder %s19, 0
    %p88 = por %p86, %p87
    %s90 = sadd.s32 %s89, 1
    %p93 = scmp.eq.s32.totalorder %s13, 1
    %p94 = scmp.ne.s32.totalorder %s89, %s91
    %p95 = scmp.eq.s32.totalorder %s13, 0
    %p96 = por %p94, %p95
    %p97 = scmp.ne.s32.totalorder %s89, %s91
    %p98 = scmp.eq.s32.totalorder %s18, 1
    %p99 = por %p97, %p98
    %p100 = scmp.ne.s32.totalorder %s91, %s92
    %p101 = scmp.eq.s32.totalorder %s18, 0
    %p102 = por %p100, %p101
    %p103 = scmp.ne.s32.totalorder %s91, %s92
    %p104 = scmp.eq.s32.totalorder %s19, 1
    %p105 = por %p103, %p104
    %p107 = scmp.ne.s32.totalorder %s92, %s106
    %p108 = scmp.eq.s32.totalorder %s19, 0
    %p109 = por %p107, %p108
    %s111 = sadd.s32 %s110, 1
    %p114 = scmp.eq.s32.totalorder %s13, 1
    %p115 = scmp.ne.s32.totalorder %s110, %s112
    %p116 = scmp.eq.s32.totalorder %s13, 0
    %p117 = por %p115, %p116
    %p118 = scmp.ne.s32.totalorder %s110, %s112
    %p119 = scmp.eq.s32.totalorder %s18, 1
    %p120 = por %p118, %p119
    %p121 = scmp.ne.s32.totalorder %s112, %s113
    %p122 = scmp.eq.s32.totalorder %s18, 0
    %p123 = por %p121, %p122
    %p124 = scmp.ne.s32.totalorder %s112, %s113
    %p125 = scmp.eq.s32.totalorder %s19, 1
    %p126 = por %p124, %p125
    %p128 = scmp.ne.s32.totalorder %s113, %s127
    %p129 = scmp.eq.s32.totalorder %s19, 0
    %p130 = por %p128, %p129
    %s132 = sadd.s32 %s131, 1
    %p135 = scmp.eq.s32.totalorder %s13, 1
    %p136 = scmp.ne.s32.totalorder %s131, %s133
    %p137 = scmp.eq.s32.totalorder %s13, 0
    %p138 = por %p136, %p137
    %p139 = scmp.ne.s32.totalorder %s131, %s133
    %p140 = scmp.eq.s32.totalorder %s18, 1
    %p141 = por %p139, %p140
    %p142 = scmp.ne.s32.totalorder %s133, %s134
    %p143 = scmp.eq.s32.totalorder %s18, 0
    %p144 = por %p142, %p143
    %p145 = scmp.ne.s32.totalorder %s133, %s134
    %p146 = scmp.eq.s32.totalorder %s19, 1
    %p147 = por %p145, %p146
    %p149 = scmp.ne.s32.totalorder %s134, %s148
    %p150 = scmp.eq.s32.totalorder %s19, 0
    %p151 = por %p149, %p150
    %s153 = sadd.s32 %s152, 1
    %p156 = scmp.eq.s32.totalorder %s13, 1
    %p157 = scmp.ne.s32.totalorder %s152, %s154
    %p158 = scmp.eq.s32.totalorder %s13, 0
    %p159 = por %p157, %p158
    %p160 = scmp.ne.s32.totalorder %s152, %s154
    %p161 = scmp.eq.s32.totalorder %s18, 1
    %p162 = por %p160, %p161
    %p163 = scmp.ne.s32.totalorder %s154, %s155
    %p164 = scmp.eq.s32.totalorder %s18, 0
    %p165 = por %p163, %p164
    %p166 = scmp.ne.s32.totalorder %s154, %s155
    %p167 = scmp.eq.s32.totalorder %s19, 1
    %p168 = por %p166, %p167
    %p170 = scmp.ne.s32.totalorder %s155, %s169
    %p171 = scmp.eq.s32.totalorder %s19, 0
    %p172 = por %p170, %p171
    %s173 = ssub.s32 %s13, %s20
    %p174 = scmp.eq.s32.totalorder %s173, 0
    %s176 = sadd.s32 %s175, 1
    %s177 = scalar_select %p174, %s175, %s176
    %p180 = pneg %p174
    %p181 = scmp.eq.s32.totalorder %s13, 1
    %p182 = por %p180, %p181
    %p183 = scmp.ne.s32.totalorder %s175, %s178
    %p184 = scmp.eq.s32.totalorder %s13, 0
    %p185 = por %p183, %p184
    %p186 = scmp.ne.s32.totalorder %s175, %s178
    %p187 = scmp.eq.s32.totalorder %s18, 1
    %p188 = por %p186, %p187
    %p189 = scmp.ne.s32.totalorder %s178, %s179
    %p190 = scmp.eq.s32.totalorder %s18, 0
    %p191 = por %p189, %p190
    %p192 = scmp.ne.s32.totalorder %s178, %s179
    %p193 = scmp.eq.s32.totalorder %s19, 1
    %p194 = por %p192, %p193
    %p196 = scmp.ne.s32.totalorder %s179, %s195
    %p197 = scmp.eq.s32.totalorder %s19, 0
    %p198 = por %p196, %p197
    %p199 = scmp.le.s32.totalorder 1, %s13
    %p200 = scmp.lt.s32.totalorder %s13, 3
    %p201 = pnand %p199, %p200
    %p202 = pneg %p201
    // Predicated region
    $region9: #{tpu_custom_call.1} parent=5 // pred_check
      _
    $region10: #{tpu_custom_call.1} parent=5 // pred_check_branch
      %204 = sbr.rel (%p201) target = $region12
    $region11: #{tpu_custom_call.1} parent=5 // pred_region
      %s205 = ssub.s32 %s13, 1
      // Predicated region
      $region13: #{tpu_custom_call.1} parent=11 // pred_check
        %p206 = pneg %p60
      $region14: #{tpu_custom_call.1} parent=11 // pred_check_branch
        %208 = sbr.rel (%p206) target = $region16
      $region15: #{tpu_custom_call.1} parent=11 // pred_region
        _
      $region16: #{tpu_custom_call.1} parent=11 // pred_fallthru
        _
      // Predicated region
      $region17: #{tpu_custom_call.1} parent=11 // pred_check
        %p209 = pneg %p81
      $region18: #{tpu_custom_call.1} parent=11 // pred_check_branch
        %211 = sbr.rel (%p209) target = $region20
      $region19: #{tpu_custom_call.1} parent=11 // pred_region
        _
      $region20: #{tpu_custom_call.1} parent=11 // pred_fallthru
        _
      // Predicated region
      $region21: #{tpu_custom_call.1} parent=11 // pred_check
        %p212 = pneg %p102
      $region22: #{tpu_custom_call.1} parent=11 // pred_check_branch
        %214 = sbr.rel (%p212) target = $region24
      $region23: #{tpu_custom_call.1} parent=11 // pred_region
        _
      $region24: #{tpu_custom_call.1} parent=11 // pred_fallthru
        _
      // Predicated region
      $region25: #{tpu_custom_call.1} parent=11 // pred_check
        %p215 = pneg %p123
      $region26: #{tpu_custom_call.1} parent=11 // pred_check_branch
        %217 = sbr.rel (%p215) target = $region28
      $region27: #{tpu_custom_call.1} parent=11 // pred_region
        _
      $region28: #{tpu_custom_call.1} parent=11 // pred_fallthru
        _
      // Predicated region
      $region29: #{tpu_custom_call.1} parent=11 // pred_check
        %p218 = pneg %p144
      $region30: #{tpu_custom_call.1} parent=11 // pred_check_branch
        %220 = sbr.rel (%p218) target = $region32
      $region31: #{tpu_custom_call.1} parent=11 // pred_region
        _
      $region32: #{tpu_custom_call.1} parent=11 // pred_fallthru
        _
      // Predicated region
      $region33: #{tpu_custom_call.1} parent=11 // pred_check
        %p221 = pneg %p165
      $region34: #{tpu_custom_call.1} parent=11 // pred_check_branch
        %223 = sbr.rel (%p221) target = $region36
      $region35: #{tpu_custom_call.1} parent=11 // pred_region
        _
      $region36: #{tpu_custom_call.1} parent=11 // pred_fallthru
        _
    $region12: #{tpu_custom_call.1} parent=5 // pred_fallthru
      _
    %p224 = scmp.lt.s32.totalorder %s13, 2
    // Predicated region
    $region37: #{tpu_custom_call.1} parent=5 // pred_check
      %p225 = pneg %p224
    $region38: #{tpu_custom_call.1} parent=5 // pred_check_branch
      %227 = sbr.rel (%p225) target = $region40
    $region39: #{tpu_custom_call.1} parent=5 // pred_region
      // Predicated region
      $region41: #{tpu_custom_call.1} parent=39 // pred_check
        %p228 = pneg %p33
      $region42: #{tpu_custom_call.1} parent=39 // pred_check_branch
        %230 = sbr.rel (%p228) target = $region44
      $region43: #{tpu_custom_call.1} parent=39 // pred_region
        %s231 = smul.u32 16, %s13
        %p232 = scmp.lt.s32.totalorder %s231, 31
        %s233 = scalar_select %p232, %s231, 31
        %s234 = smul.addr %s233, 4
        %s235 = scalar_lea.vmem %s0, %s234
        %s236 = smul.u32 16, %s13
      $region44: #{tpu_custom_call.1} parent=39 // pred_fallthru
        _
    $region40: #{tpu_custom_call.1} parent=5 // pred_fallthru
      _
    %p237 = scmp.le.s32.totalorder 1, %s13
    %p238 = scmp.lt.s32.totalorder %s13, 3
    %p239 = pnand %p237, %p238
    %p240 = pneg %p239
    // Predicated region
    $region45: #{tpu_custom_call.1} parent=5 // pred_check
      _
    $region46: #{tpu_custom_call.1} parent=5 // pred_check_branch
      %242 = sbr.rel (%p239) target = $region48
    $region47: #{tpu_custom_call.1} parent=5 // pred_region
      %s243 = ssub.s32 %s13, 1
      %s244 = smul.u32 16, %s18
      %p245 = scmp.lt.s32.totalorder %s244, 31
      %s246 = scalar_select %p245, %s244, 31
      %s247 = smul.addr %s246, 4
      %s248 = scalar_lea.vmem %s0, %s247
      %p249 = pneg %p39
      %p250 = pneg %p36
      %p251 = pneg %p60
      %p252 = pneg %p57
      %p253 = pneg %p81
      %p254 = pneg %p78
      %p255 = pneg %p102
      %p256 = pneg %p99
      %p257 = pneg %p123
      %p258 = pneg %p120
      %p259 = pneg %p144
      %p260 = pneg %p141
      %p261 = pneg %p165
      %p262 = pneg %p162
      %p263 = pneg %p191
      %p264 = pneg %p188
      %s265 = smul.u32 16, %s18
      %p266 = scmp.lt.s32.totalorder %s265, 31
      %s267 = scalar_select %p266, %s265, 31
      %s268 = smul.addr %s267, 8
      %s269 = scalar_lea.vmem %s7, %s268
      %s270 = smul.u32 16, %s18
      %p271 = scmp.lt.s32.totalorder %s270, 31
      %s272 = scalar_select %p271, %s270, 31
      %s273 = smul.addr %s272, 4
      %s274 = scalar_lea.vmem %s0, %s273
      %s275 = smul.u32 16, %s18
      %s276 = smul.u32 16, %s18
      %p277 = scmp.lt.s32.totalorder %s276, 31
      %s278 = scalar_select %p277, %s276, 31
      %s279 = smul.addr %s278, 8
      %s280 = scalar_lea.vmem %s7, %s279
      %s281 = smul.u32 16, %s18
      %v283 = vld [vmem:[%s274] sm:$0xf]
      %v284 = vld [vmem:[%s274 + $0x4] sm:$0xf]
      %v285 = vld [vmem:[%s274 + $0x8] sm:$0xf]
      %v286 = vld [vmem:[%s274 + $0xc] sm:$0xf]
      %v287 = vld [vmem:[%s274 + $0x10] sm:$0xf]
      %v288 = vld [vmem:[%s274 + $0x14] sm:$0xf]
      %v289 = vld [vmem:[%s274 + $0x18] sm:$0xf]
      %v290 = vld [vmem:[%s274 + $0x1c] sm:$0xf]
      %v291 = vld [vmem:[%s274 + $0x20] sm:$0xf]
      %v292 = vld [vmem:[%s274 + $0x24] sm:$0xf]
      %v293 = vld [vmem:[%s274 + $0x28] sm:$0xf]
      %v294 = vld [vmem:[%s274 + $0x2c] sm:$0xf]
      %v295 = vld [vmem:[%s274 + $0x30] sm:$0xf]
      %v296 = vld [vmem:[%s274 + $0x34] sm:$0xf]
      %v297 = vld [vmem:[%s274 + $0x38] sm:$0xf]
      %v298 = vld [vmem:[%s274 + $0x3c] sm:$0xf]
      %v299 = vld [vmem:[%s1] sm:$0xf]
      %v300 = vld [vmem:[%s1 + $0x4] sm:$0xf]
      %v301 = vld [vmem:[%s2] sm:$0x1]
      %v303 = vlaneseq
      %v304 = vshrl.u32 %v303, 7
      %v305 = vsub.s32 0, %v304
      %v306 = vrot.slane %v301, %v305
      %v324 = vunpack.c.l.b16 %v283
      %v325 = vunpack.c.l.b16 %v284
      %v326 = vunpack.c.l.b16 %v285
      %v327 = vunpack.c.l.b16 %v286
      %v328 = vunpack.c.l.b16 %v287
      %v329 = vunpack.c.l.b16 %v288
      %v330 = vunpack.c.l.b16 %v289
      %v331 = vunpack.c.l.b16 %v290
      %v332 = vunpack.c.l.b16 %v291
      %v333 = vunpack.c.l.b16 %v292
      %v334 = vunpack.c.l.b16 %v293
      %v335 = vunpack.c.l.b16 %v294
      %v336 = vunpack.c.l.b16 %v295
      %v337 = vunpack.c.l.b16 %v296
      %v338 = vunpack.c.l.b16 %v297
      %v339 = vunpack.c.l.b16 %v298
      %v340 = vpack.c.b16 %v325, %v324
      %v341 = vpack.c.b16 %v327, %v326
      %v342 = vpack.c.b16 %v329, %v328
      %v343 = vpack.c.b16 %v331, %v330
      %v344 = vpack.c.b16 %v333, %v332
      %v345 = vpack.c.b16 %v335, %v334
      %v346 = vpack.c.b16 %v337, %v336
      %v347 = vpack.c.b16 %v339, %v338
      %v350 = vunpack.c.l.b16 %v299
      %v351 = vunpack.c.l.b16 %v300
      %v352 = vpack.c.b16 %v351, %v350
      %vm354 = vcmask 130048
      %v356 = vsel %vm354, %v340, 0
      %v359 = vsel %vm354, %v341, 0
      %v362 = vsel %vm354, %v342, 0
      %v365 = vsel %vm354, %v343, 0
      %v368 = vsel %vm354, %v344, 0
      %v371 = vsel %vm354, %v345, 0
      %v374 = vsel %vm354, %v346, 0
      %v377 = vsel %vm354, %v347, 0
      %379 = vmatprep.subr.bf16.mxu0 0
      %380 = vmatpush1.bf16.msra.mxu0 %v352
      %381 = vmatprep.subr.bf16.mxu0 0
      %382 = vmatpush1.bf16.msra.mxu0 0
      %383 = vmatprep.subr.bf16.mxu0 0
      %384 = vmatpush1.bf16.msra.mxu0 0
      %385 = vmatprep.subr.bf16.mxu0 0
      %386 = vmatpush1.bf16.msra.mxu0 0
      %387 = vmatprep.subr.bf16.mxu0 0
      %388 = vmatpush1.bf16.msra.mxu0 0
      %389 = vmatprep.subr.bf16.mxu0 0
      %390 = vmatpush1.bf16.msra.mxu0 0
      %391 = vmatprep.subr.bf16.mxu0 0
      %392 = vmatpush1.bf16.msra.mxu0 0
      %393 = vmatprep.subr.bf16.mxu0 0
      %394 = vmatpush1.bf16.msra.mxu0 0
      %395 = vmatprep.subr.bf16.mxu0 0
      %396 = vmatpush1.bf16.msra.mxu0 0
      %397 = vmatprep.subr.bf16.mxu0 0
      %398 = vmatpush1.bf16.msra.mxu0 0
      %399 = vmatprep.subr.bf16.mxu0 0
      %400 = vmatpush1.bf16.msra.mxu0 0
      %401 = vmatprep.subr.bf16.mxu0 0
      %402 = vmatpush1.bf16.msra.mxu0 0
      %403 = vmatprep.subr.bf16.mxu0 0
      %404 = vmatpush1.bf16.msra.mxu0 0
      %405 = vmatprep.subr.bf16.mxu0 0
      %406 = vmatpush1.bf16.msra.mxu0 0
      %407 = vmatprep.subr.bf16.mxu0 0
      %408 = vmatpush1.bf16.msra.mxu0 0
      %409 = vmatprep.subr.bf16.mxu0 0
      %410 = vmatpush1.bf16.msra.mxu0 0
      %411 = vmatprep.mubr.bf16.mxu0 0
      %412 = vmatmul.mubr.bf16.gmra.mrb[0].mxu0 %v356
      %v413 = vpop.f32.mrb[0].mxu0
      %v414 = vadd.f32 %v306, %v413
      %v415 = vpop.f32.mrb[0].mxu0
      %v416 = vpop.f32.mrb[0].mxu0
      %v417 = vadd.f32 %v306, %v416
      %v418 = vpop.f32.mrb[0].mxu0
      %419 = vmatprep.mubr.bf16.mxu0 0
      %420 = vmatmul.mubr.bf16.gmra.mrb[0].mxu0 %v359
      %v421 = vpop.f32.mrb[0].mxu0
      %v422 = vadd.f32 %v306, %v421
      %v423 = vpop.f32.mrb[0].mxu0
      %v424 = vpop.f32.mrb[0].mxu0
      %v425 = vadd.f32 %v306, %v424
      %v426 = vpop.f32.mrb[0].mxu0
      %427 = vmatprep.mubr.bf16.mxu0 0
      %428 = vmatmul.mubr.bf16.gmra.mrb[0].mxu0 %v362
      %v429 = vpop.f32.mrb[0].mxu0
      %v430 = vadd.f32 %v306, %v429
      %v431 = vpop.f32.mrb[0].mxu0
      %v432 = vpop.f32.mrb[0].mxu0
      %v433 = vadd.f32 %v306, %v432
      %v434 = vpop.f32.mrb[0].mxu0
      %435 = vmatprep.mubr.bf16.mxu0 0
      %436 = vmatmul.mubr.bf16.gmra.mrb[0].mxu0 %v365
      %v437 = vpop.f32.mrb[0].mxu0
      %v438 = vadd.f32 %v306, %v437
      %v439 = vpop.f32.mrb[0].mxu0
      %v440 = vpop.f32.mrb[0].mxu0
      %v441 = vadd.f32 %v306, %v440
      %v442 = vpop.f32.mrb[0].mxu0
      %443 = vmatprep.mubr.bf16.mxu0 0
      %444 = vmatmul.mubr.bf16.gmra.mrb[0].mxu0 %v368
      %v445 = vpop.f32.mrb[0].mxu0
      %v446 = vadd.f32 %v306, %v445
      %v447 = vpop.f32.mrb[0].mxu0
      %v448 = vpop.f32.mrb[0].mxu0
      %v449 = vadd.f32 %v306, %v448
      %v450 = vpop.f32.mrb[0].mxu0
      %451 = vmatprep.mubr.bf16.mxu0 0
      %452 = vmatmul.mubr.bf16.gmra.mrb[0].mxu0 %v371
      %v453 = vpop.f32.mrb[0].mxu0
      %v454 = vadd.f32 %v306, %v453
      %v455 = vpop.f32.mrb[0].mxu0
      %v456 = vpop.f32.mrb[0].mxu0
      %v457 = vadd.f32 %v306, %v456
      %v458 = vpop.f32.mrb[0].mxu0
      %459 = vmatprep.mubr.bf16.mxu0 0
      %460 = vmatmul.mubr.bf16.gmra.mrb[0].mxu0 %v374
      %v461 = vpop.f32.mrb[0].mxu0
      %v462 = vadd.f32 %v306, %v461
      %v463 = vpop.f32.mrb[0].mxu0
      %v464 = vpop.f32.mrb[0].mxu0
      %v465 = vadd.f32 %v306, %v464
      %v466 = vpop.f32.mrb[0].mxu0
      %467 = vmatprep.mubr.bf16.mxu0 0
      %468 = vmatmul.mubr.bf16.gmra.mrb[0].mxu0 %v377
      %v469 = vpop.f32.mrb[0].mxu0
      %v470 = vadd.f32 %v306, %v469
      %v471 = vpop.f32.mrb[0].mxu0
      %v472 = vpop.f32.mrb[0].mxu0
      %v473 = vadd.f32 %v306, %v472
      %v474 = vpop.f32.mrb[0].mxu0
      %475 = vdwg.mxu0
      %v476 = vpack.c.bf16 %v417, %v414
      %v477 = vpack.c.bf16 %v425, %v422
      %v478 = vpack.c.bf16 %v433, %v430
      %v479 = vpack.c.bf16 %v441, %v438
      %v480 = vpack.c.bf16 %v449, %v446
      %v481 = vpack.c.bf16 %v457, %v454
      %v482 = vpack.c.bf16 %v465, %v462
      %v483 = vpack.c.bf16 %v473, %v470
      %v484 = vld [vmem:[%s3] sm:$0xf]
      %v485 = vld [vmem:[%s3 + $0x4] sm:$0xf]
      %v486 = vld [vmem:[%s3 + $0x8] sm:$0xf]
      %v487 = vld [vmem:[%s3 + $0xc] sm:$0xf]
      %v488 = vld [vmem:[%s3 + $0x10] sm:$0xf]
      %v489 = vld [vmem:[%s3 + $0x14] sm:$0xf]
      %v490 = vld [vmem:[%s3 + $0x18] sm:$0xf]
      %v491 = vld [vmem:[%s3 + $0x1c] sm:$0xf]
      %v492 = vld [vmem:[%s3 + $0x20] sm:$0xf]
      %v493 = vld [vmem:[%s3 + $0x24] sm:$0xf]
      %v494 = vld [vmem:[%s3 + $0x28] sm:$0xf]
      %v495 = vld [vmem:[%s3 + $0x2c] sm:$0xf]
      %v496 = vld [vmem:[%s3 + $0x30] sm:$0xf]
      %v497 = vld [vmem:[%s3 + $0x34] sm:$0xf]
      %v498 = vld [vmem:[%s3 + $0x38] sm:$0xf]
      %v499 = vld [vmem:[%s3 + $0x3c] sm:$0xf]
      %v500 = vld [vmem:[%s4] sm:$0x1]
      %v502 = vlaneseq
      %v503 = vshrl.u32 %v502, 7
      %v504 = vsub.s32 0, %v503
      %v505 = vrot.slane %v500, %v504
      %v523 = vunpack.c.l.b16 %v484
      %v524 = vunpack.c.l.b16 %v485
      %v525 = vunpack.c.l.b16 %v486
      %v526 = vunpack.c.l.b16 %v487
      %v527 = vunpack.c.l.b16 %v488
      %v528 = vunpack.c.l.b16 %v489
      %v529 = vunpack.c.l.b16 %v490
      %v530 = vunpack.c.l.b16 %v491
      %v531 = vunpack.c.l.b16 %v492
      %v532 = vunpack.c.l.b16 %v493
      %v533 = vunpack.c.l.b16 %v494
      %v534 = vunpack.c.l.b16 %v495
      %v535 = vunpack.c.l.b16 %v496
      %v536 = vunpack.c.l.b16 %v497
      %v537 = vunpack.c.l.b16 %v498
      %v538 = vunpack.c.l.b16 %v499
      %v539 = vpack.c.b16 %v524, %v523
      %v540 = vpack.c.b16 %v526, %v525
      %v541 = vpack.c.b16 %v528, %v527
      %v542 = vpack.c.b16 %v530, %v529
      %v543 = vpack.c.b16 %v532, %v531
      %v544 = vpack.c.b16 %v534, %v533
      %v545 = vpack.c.b16 %v536, %v535
      %v546 = vpack.c.b16 %v538, %v537
      %555 = vmatprep.subr.bf16.mxu0 0
      %556 = vmatpush1.bf16.msra.mxu0 %v539
      %557 = vmatprep.subr.bf16.mxu0 0
      %558 = vmatpush1.bf16.msra.mxu0 %v540
      %559 = vmatprep.subr.bf16.mxu0 0
      %560 = vmatpush1.bf16.msra.mxu0 %v541
      %561 = vmatprep.subr.bf16.mxu0 0
      %562 = vmatpush1.bf16.msra.mxu0 %v542
      %563 = vmatprep.subr.bf16.mxu0 0
      %564 = vmatpush1.bf16.msra.mxu0 %v543
      %565 = vmatprep.subr.bf16.mxu0 0
      %566 = vmatpush1.bf16.msra.mxu0 %v544
      %567 = vmatprep.subr.bf16.mxu0 0
      %568 = vmatpush1.bf16.msra.mxu0 %v545
      %569 = vmatprep.subr.bf16.mxu0 0
      %570 = vmatpush1.bf16.msra.mxu0 %v546
      %571 = vmatprep.subr.bf16.mxu0 0
      %572 = vmatpush1.bf16.msra.mxu0 0
      %573 = vmatprep.subr.bf16.mxu0 0
      %574 = vmatpush1.bf16.msra.mxu0 0
      %575 = vmatprep.subr.bf16.mxu0 0
      %576 = vmatpush1.bf16.msra.mxu0 0
      %577 = vmatprep.subr.bf16.mxu0 0
      %578 = vmatpush1.bf16.msra.mxu0 0
      %579 = vmatprep.subr.bf16.mxu0 0
      %580 = vmatpush1.bf16.msra.mxu0 0
      %581 = vmatprep.subr.bf16.mxu0 0
      %582 = vmatpush1.bf16.msra.mxu0 0
      %583 = vmatprep.subr.bf16.mxu0 0
      %584 = vmatpush1.bf16.msra.mxu0 0
      %585 = vmatprep.subr.bf16.mxu0 0
      %586 = vmatpush1.bf16.msra.mxu0 0
      %587 = vmatprep.mubr.bf16.mxu0 0
      %588 = vmatmul.mubr.bf16.gmra.mrb[0].mxu0 %v476
      %v589 = vpop.f32.mrb[0].mxu0
      %v590 = vadd.f32 %v505, %v589
      %v591 = vpop.f32.mrb[0].mxu0
      %v592 = vpop.f32.mrb[0].mxu0
      %v593 = vadd.f32 %v505, %v592
      %v594 = vpop.f32.mrb[0].mxu0
      %595 = vmatprep.mubr.bf16.mxu0 0
      %596 = vmatmul.mubr.bf16.gmra.mrb[0].mxu0 %v477
      %v597 = vpop.f32.mrb[0].mxu0
      %v598 = vadd.f32 %v505, %v597
      %v599 = vpop.f32.mrb[0].mxu0
      %v600 = vpop.f32.mrb[0].mxu0
      %v601 = vadd.f32 %v505, %v600
      %v602 = vpop.f32.mrb[0].mxu0
      %603 = vmatprep.mubr.bf16.mxu0 0
      %604 = vmatmul.mubr.bf16.gmra.mrb[0].mxu0 %v478
      %v605 = vpop.f32.mrb[0].mxu0
      %v606 = vadd.f32 %v505, %v605
      %v607 = vpop.f32.mrb[0].mxu0
      %v608 = vpop.f32.mrb[0].mxu0
      %v609 = vadd.f32 %v505, %v608
      %v610 = vpop.f32.mrb[0].mxu0
      %611 = vmatprep.mubr.bf16.mxu0 0
      %612 = vmatmul.mubr.bf16.gmra.mrb[0].mxu0 %v479
      %v613 = vpop.f32.mrb[0].mxu0
      %v614 = vadd.f32 %v505, %v613
      %v615 = vpop.f32.mrb[0].mxu0
      %v616 = vpop.f32.mrb[0].mxu0
      %v617 = vadd.f32 %v505, %v616
      %v618 = vpop.f32.mrb[0].mxu0
      %619 = vmatprep.mubr.bf16.mxu0 0
      %620 = vmatmul.mubr.bf16.gmra.mrb[0].mxu0 %v480
      %v621 = vpop.f32.mrb[0].mxu0
      %v622 = vadd.f32 %v505, %v621
      %v623 = vpop.f32.mrb[0].mxu0
      %v624 = vpop.f32.mrb[0].mxu0
      %v625 = vadd.f32 %v505, %v624
      %v626 = vpop.f32.mrb[0].mxu0
      %627 = vmatprep.mubr.bf16.mxu0 0
      %628 = vmatmul.mubr.bf16.gmra.mrb[0].mxu0 %v481
      %v629 = vpop.f32.mrb[0].mxu0
      %v630 = vadd.f32 %v505, %v629
      %v631 = vpop.f32.mrb[0].mxu0
      %v632 = vpop.f32.mrb[0].mxu0
      %v633 = vadd.f32 %v505, %v632
      %v634 = vpop.f32.mrb[0].mxu0
      %635 = vmatprep.mubr.bf16.mxu0 0
      %636 = vmatmul.mubr.bf16.gmra.mrb[0].mxu0 %v482
      %v637 = vpop.f32.mrb[0].mxu0
      %v638 = vadd.f32 %v505, %v637
      %v639 = vpop.f32.mrb[0].mxu0
      %v640 = vpop.f32.mrb[0].mxu0
      %v641 = vadd.f32 %v505, %v640
      %v642 = vpop.f32.mrb[0].mxu0
      %643 = vmatprep.mubr.bf16.mxu0 0
      %644 = vmatmul.mubr.bf16.gmra.mrb[0].mxu0 %v483
      %v645 = vpop.f32.mrb[0].mxu0
      %v646 = vadd.f32 %v505, %v645
      %v647 = vpop.f32.mrb[0].mxu0
      %v648 = vpop.f32.mrb[0].mxu0
      %v649 = vadd.f32 %v505, %v648
      %v650 = vpop.f32.mrb[0].mxu0
      %651 = vdwg.mxu0
      %v652 = vmax.f32 %v590, 0.0
      %v653 = vmax.f32 %v593, 0.0
      %v654 = vmax.f32 %v598, 0.0
      %v655 = vmax.f32 %v601, 0.0
      %v656 = vmax.f32 %v606, 0.0
      %v657 = vmax.f32 %v609, 0.0
      %v658 = vmax.f32 %v614, 0.0
      %v659 = vmax.f32 %v617, 0.0
      %v660 = vmax.f32 %v622, 0.0
      %v661 = vmax.f32 %v625, 0.0
      %v662 = vmax.f32 %v630, 0.0
      %v663 = vmax.f32 %v633, 0.0
      %v664 = vmax.f32 %v638, 0.0
      %v665 = vmax.f32 %v641, 0.0
      %v666 = vmax.f32 %v646, 0.0
      %v667 = vmax.f32 %v649, 0.0
      %v668 = vadd.f32 %v414, %v652
      %v669 = vadd.f32 %v417, %v653
      %v670 = vadd.f32 %v422, %v654
      %v671 = vadd.f32 %v425, %v655
      %v672 = vadd.f32 %v430, %v656
      %v673 = vadd.f32 %v433, %v657
      %v674 = vadd.f32 %v438, %v658
      %v675 = vadd.f32 %v441, %v659
      %v676 = vadd.f32 %v446, %v660
      %v677 = vadd.f32 %v449, %v661
      %v678 = vadd.f32 %v454, %v662
      %v679 = vadd.f32 %v457, %v663
      %v680 = vadd.f32 %v462, %v664
      %v681 = vadd.f32 %v465, %v665
      %v682 = vadd.f32 %v470, %v666
      %v683 = vadd.f32 %v473, %v667
      %v684 = vpack.c.bf16 %v669, %v668
      %v685 = vpack.c.bf16 %v671, %v670
      %v686 = vpack.c.bf16 %v673, %v672
      %v687 = vpack.c.bf16 %v675, %v674
      %v688 = vpack.c.bf16 %v677, %v676
      %v689 = vpack.c.bf16 %v679, %v678
      %v690 = vpack.c.bf16 %v681, %v680
      %v691 = vpack.c.bf16 %v683, %v682
      %s692 = scalar_lea.vmem %s3, 64
      %v693 = vld [vmem:[%s692] sm:$0xf]
      %v694 = vld [vmem:[%s692 + $0x4] sm:$0xf]
      %v695 = vld [vmem:[%s692 + $0x8] sm:$0xf]
      %v696 = vld [vmem:[%s692 + $0xc] sm:$0xf]
      %v697 = vld [vmem:[%s692 + $0x10] sm:$0xf]
      %v698 = vld [vmem:[%s692 + $0x14] sm:$0xf]
      %v699 = vld [vmem:[%s692 + $0x18] sm:$0xf]
      %v700 = vld [vmem:[%s692 + $0x1c] sm:$0xf]
      %v701 = vld [vmem:[%s692 + $0x20] sm:$0xf]
      %v702 = vld [vmem:[%s692 + $0x24] sm:$0xf]
      %v703 = vld [vmem:[%s692 + $0x28] sm:$0xf]
      %v704 = vld [vmem:[%s692 + $0x2c] sm:$0xf]
      %v705 = vld [vmem:[%s692 + $0x30] sm:$0xf]
      %v706 = vld [vmem:[%s692 + $0x34] sm:$0xf]
      %v707 = vld [vmem:[%s692 + $0x38] sm:$0xf]
      %v708 = vld [vmem:[%s692 + $0x3c] sm:$0xf]
      %s709 = scalar_lea.vmem %s4, 1
      %v710 = vld [vmem:[%s709] sm:$0x1]
      %v712 = vlaneseq
      %v713 = vshrl.u32 %v712, 7
      %v714 = vsub.s32 0, %v713
      %v715 = vrot.slane %v710, %v714
      %v733 = vunpack.c.l.b16 %v693
      %v734 = vunpack.c.l.b16 %v694
      %v735 = vunpack.c.l.b16 %v695
      %v736 = vunpack.c.l.b16 %v696
      %v737 = vunpack.c.l.b16 %v697
      %v738 = vunpack.c.l.b16 %v698
      %v739 = vunpack.c.l.b16 %v699
      %v740 = vunpack.c.l.b16 %v700
      %v741 = vunpack.c.l.b16 %v701
      %v742 = vunpack.c.l.b16 %v702
      %v743 = vunpack.c.l.b16 %v703
      %v744 = vunpack.c.l.b16 %v704
      %v745 = vunpack.c.l.b16 %v705
      %v746 = vunpack.c.l.b16 %v706
      %v747 = vunpack.c.l.b16 %v707
      %v748 = vunpack.c.l.b16 %v708
      %v749 = vpack.c.b16 %v734, %v733
      %v750 = vpack.c.b16 %v736, %v735
      %v751 = vpack.c.b16 %v738, %v737
      %v752 = vpack.c.b16 %v740, %v739
      %v753 = vpack.c.b16 %v742, %v741
      %v754 = vpack.c.b16 %v744, %v743
      %v755 = vpack.c.b16 %v746, %v745
      %v756 = vpack.c.b16 %v748, %v747
      %765 = vmatprep.subr.bf16.mxu0 0
      %766 = vmatpush1.bf16.msra.mxu0 %v749
      %767 = vmatprep.subr.bf16.mxu0 0
      %768 = vmatpush1.bf16.msra.mxu0 %v750
      %769 = vmatprep.subr.bf16.mxu0 0
      %770 = vmatpush1.bf16.msra.mxu0 %v751
      %771 = vmatprep.subr.bf16.mxu0 0
      %772 = vmatpush1.bf16.msra.mxu0 %v752
      %773 = vmatprep.subr.bf16.mxu0 0
      %774 = vmatpush1.bf16.msra.mxu0 %v753
      %775 = vmatprep.subr.bf16.mxu0 0
      %776 = vmatpush1.bf16.msra.mxu0 %v754
      %777 = vmatprep.subr.bf16.mxu0 0
      %778 = vmatpush1.bf16.msra.mxu0 %v755
      %779 = vmatprep.subr.bf16.mxu0 0
      %780 = vmatpush1.bf16.msra.mxu0 %v756
      %781 = vmatprep.subr.bf16.mxu0 0
      %782 = vmatpush1.bf16.msra.mxu0 0
      %783 = vmatprep.subr.bf16.mxu0 0
      %784 = vmatpush1.bf16.msra.mxu0 0
      %785 = vmatprep.subr.bf16.mxu0 0
      %786 = vmatpush1.bf16.msra.mxu0 0
      %787 = vmatprep.subr.bf16.mxu0 0
      %788 = vmatpush1.bf16.msra.mxu0 0
      %789 = vmatprep.subr.bf16.mxu0 0
      %790 = vmatpush1.bf16.msra.mxu0 0
      %791 = vmatprep.subr.bf16.mxu0 0
      %792 = vmatpush1.bf16.msra.mxu0 0
      %793 = vmatprep.subr.bf16.mxu0 0
      %794 = vmatpush1.bf16.msra.mxu0 0
      %795 = vmatprep.subr.bf16.mxu0 0
      %796 = vmatpush1.bf16.msra.mxu0 0
      %797 = vmatprep.mubr.bf16.mxu0 0
      %798 = vmatmul.mubr.bf16.gmra.mrb[0].mxu0 %v684
      %v799 = vpop.f32.mrb[0].mxu0
      %v800 = vadd.f32 %v715, %v799
      %v801 = vpop.f32.mrb[0].mxu0
      %v802 = vpop.f32.mrb[0].mxu0
      %v803 = vadd.f32 %v715, %v802
      %v804 = vpop.f32.mrb[0].mxu0
      %805 = vmatprep.mubr.bf16.mxu0 0
      %806 = vmatmul.mubr.bf16.gmra.mrb[0].mxu0 %v685
      %v807 = vpop.f32.mrb[0].mxu0
      %v808 = vadd.f32 %v715, %v807
      %v809 = vpop.f32.mrb[0].mxu0
      %v810 = vpop.f32.mrb[0].mxu0
      %v811 = vadd.f32 %v715, %v810
      %v812 = vpop.f32.mrb[0].mxu0
      %813 = vmatprep.mubr.bf16.mxu0 0
      %814 = vmatmul.mubr.bf16.gmra.mrb[0].mxu0 %v686
      %v815 = vpop.f32.mrb[0].mxu0
      %v816 = vadd.f32 %v715, %v815
      %v817 = vpop.f32.mrb[0].mxu0
      %v818 = vpop.f32.mrb[0].mxu0
      %v819 = vadd.f32 %v715, %v818
      %v820 = vpop.f32.mrb[0].mxu0
      %821 = vmatprep.mubr.bf16.mxu0 0
      %822 = vmatmul.mubr.bf16.gmra.mrb[0].mxu0 %v687
      %v823 = vpop.f32.mrb[0].mxu0
      %v824 = vadd.f32 %v715, %v823
      %v825 = vpop.f32.mrb[0].mxu0
      %v826 = vpop.f32.mrb[0].mxu0
      %v827 = vadd.f32 %v715, %v826
      %v828 = vpop.f32.mrb[0].mxu0
      %829 = vmatprep.mubr.bf16.mxu0 0
      %830 = vmatmul.mubr.bf16.gmra.mrb[0].mxu0 %v688
      %v831 = vpop.f32.mrb[0].mxu0
      %v832 = vadd.f32 %v715, %v831
      %v833 = vpop.f32.mrb[0].mxu0
      %v834 = vpop.f32.mrb[0].mxu0
      %v835 = vadd.f32 %v715, %v834
      %v836 = vpop.f32.mrb[0].mxu0
      %837 = vmatprep.mubr.bf16.mxu0 0
      %838 = vmatmul.mubr.bf16.gmra.mrb[0].mxu0 %v689
      %v839 = vpop.f32.mrb[0].mxu0
      %v840 = vadd.f32 %v715, %v839
      %v841 = vpop.f32.mrb[0].mxu0
      %v842 = vpop.f32.mrb[0].mxu0
      %v843 = vadd.f32 %v715, %v842
      %v844 = vpop.f32.mrb[0].mxu0
      %845 = vmatprep.mubr.bf16.mxu0 0
      %846 = vmatmul.mubr.bf16.gmra.mrb[0].mxu0 %v690
      %v847 = vpop.f32.mrb[0].mxu0
      %v848 = vadd.f32 %v715, %v847
      %v849 = vpop.f32.mrb[0].mxu0
      %v850 = vpop.f32.mrb[0].mxu0
      %v851 = vadd.f32 %v715, %v850
      %v852 = vpop.f32.mrb[0].mxu0
      %853 = vmatprep.mubr.bf16.mxu0 0
      %854 = vmatmul.mubr.bf16.gmra.mrb[0].mxu0 %v691
      %v855 = vpop.f32.mrb[0].mxu0
      %v856 = vadd.f32 %v715, %v855
      %v857 = vpop.f32.mrb[0].mxu0
      %v858 = vpop.f32.mrb[0].mxu0
      %v859 = vadd.f32 %v715, %v858
      %v860 = vpop.f32.mrb[0].mxu0
      %861 = vdwg.mxu0
      %v862 = vmax.f32 %v800, 0.0
      %v863 = vmax.f32 %v803, 0.0
      %v864 = vmax.f32 %v808, 0.0
      %v865 = vmax.f32 %v811, 0.0
      %v866 = vmax.f32 %v816, 0.0
      %v867 = vmax.f32 %v819, 0.0
      %v868 = vmax.f32 %v824, 0.0
      %v869 = vmax.f32 %v827, 0.0
      %v870 = vmax.f32 %v832, 0.0
      %v871 = vmax.f32 %v835, 0.0
      %v872 = vmax.f32 %v840, 0.0
      %v873 = vmax.f32 %v843, 0.0
      %v874 = vmax.f32 %v848, 0.0
      %v875 = vmax.f32 %v851, 0.0
      %v876 = vmax.f32 %v856, 0.0
      %v877 = vmax.f32 %v859, 0.0
      %v878 = vadd.f32 %v668, %v862
      %v879 = vadd.f32 %v669, %v863
      %v880 = vadd.f32 %v670, %v864
      %v881 = vadd.f32 %v671, %v865
      %v882 = vadd.f32 %v672, %v866
      %v883 = vadd.f32 %v673, %v867
      %v884 = vadd.f32 %v674, %v868
      %v885 = vadd.f32 %v675, %v869
      %v886 = vadd.f32 %v676, %v870
      %v887 = vadd.f32 %v677, %v871
      %v888 = vadd.f32 %v678, %v872
      %v889 = vadd.f32 %v679, %v873
      %v890 = vadd.f32 %v680, %v874
      %v891 = vadd.f32 %v681, %v875
      %v892 = vadd.f32 %v682, %v876
      %v893 = vadd.f32 %v683, %v877
      %v894 = vpack.c.bf16 %v879, %v878
      %v895 = vpack.c.bf16 %v881, %v880
      %v896 = vpack.c.bf16 %v883, %v882
      %v897 = vpack.c.bf16 %v885, %v884
      %v898 = vpack.c.bf16 %v887, %v886
      %v899 = vpack.c.bf16 %v889, %v888
      %v900 = vpack.c.bf16 %v891, %v890
      %v901 = vpack.c.bf16 %v893, %v892
      %s902 = scalar_lea.vmem %s3, 128
      %v903 = vld [vmem:[%s902] sm:$0xf]
      %v904 = vld [vmem:[%s902 + $0x4] sm:$0xf]
      %v905 = vld [vmem:[%s902 + $0x8] sm:$0xf]
      %v906 = vld [vmem:[%s902 + $0xc] sm:$0xf]
      %v907 = vld [vmem:[%s902 + $0x10] sm:$0xf]
      %v908 = vld [vmem:[%s902 + $0x14] sm:$0xf]
      %v909 = vld [vmem:[%s902 + $0x18] sm:$0xf]
      %v910 = vld [vmem:[%s902 + $0x1c] sm:$0xf]
      %v911 = vld [vmem:[%s902 + $0x20] sm:$0xf]
      %v912 = vld [vmem:[%s902 + $0x24] sm:$0xf]
      %v913 = vld [vmem:[%s902 + $0x28] sm:$0xf]
      %v914 = vld [vmem:[%s902 + $0x2c] sm:$0xf]
      %v915 = vld [vmem:[%s902 + $0x30] sm:$0xf]
      %v916 = vld [vmem:[%s902 + $0x34] sm:$0xf]
      %v917 = vld [vmem:[%s902 + $0x38] sm:$0xf]
      %v918 = vld [vmem:[%s902 + $0x3c] sm:$0xf]
      %s919 = scalar_lea.vmem %s4, 2
      %v920 = vld [vmem:[%s919] sm:$0x1]
      %v922 = vlaneseq
      %v923 = vshrl.u32 %v922, 7
      %v924 = vsub.s32 0, %v923
      %v925 = vrot.slane %v920, %v924
      %v943 = vunpack.c.l.b16 %v903
      %v944 = vunpack.c.l.b16 %v904
      %v945 = vunpack.c.l.b16 %v905
      %v946 = vunpack.c.l.b16 %v906
      %v947 = vunpack.c.l.b16 %v907
      %v948 = vunpack.c.l.b16 %v908
      %v949 = vunpack.c.l.b16 %v909
      %v950 = vunpack.c.l.b16 %v910
      %v951 = vunpack.c.l.b16 %v911
      %v952 = vunpack.c.l.b16 %v912
      %v953 = vunpack.c.l.b16 %v913
      %v954 = vunpack.c.l.b16 %v914
      %v955 = vunpack.c.l.b16 %v915
      %v956 = vunpack.c.l.b16 %v916
      %v957 = vunpack.c.l.b16 %v917
      %v958 = vunpack.c.l.b16 %v918
      %v959 = vpack.c.b16 %v944, %v943
      %v960 = vpack.c.b16 %v946, %v945
      %v961 = vpack.c.b16 %v948, %v947
      %v962 = vpack.c.b16 %v950, %v949
      %v963 = vpack.c.b16 %v952, %v951
      %v964 = vpack.c.b16 %v954, %v953
      %v965 = vpack.c.b16 %v956, %v955
      %v966 = vpack.c.b16 %v958, %v957
      %975 = vmatprep.subr.bf16.mxu0 0
      %976 = vmatpush1.bf16.msra.mxu0 %v959
      %977 = vmatprep.subr.bf16.mxu0 0
      %978 = vmatpush1.bf16.msra.mxu0 %v960
      %979 = vmatprep.subr.bf16.mxu0 0
      %980 = vmatpush1.bf16.msra.mxu0 %v961
      %981 = vmatprep.subr.bf16.mxu0 0
      %982 = vmatpush1.bf16.msra.mxu0 %v962
      %983 = vmatprep.subr.bf16.mxu0 0
      %984 = vmatpush1.bf16.msra.mxu0 %v963
      %985 = vmatprep.subr.bf16.mxu0 0
      %986 = vmatpush1.bf16.msra.mxu0 %v964
      %987 = vmatprep.subr.bf16.mxu0 0
      %988 = vmatpush1.bf16.msra.mxu0 %v965
      %989 = vmatprep.subr.bf16.mxu0 0
      %990 = vmatpush1.bf16.msra.mxu0 %v966
      %991 = vmatprep.subr.bf16.mxu0 0
      %992 = vmatpush1.bf16.msra.mxu0 0
      %993 = vmatprep.subr.bf16.mxu0 0
      %994 = vmatpush1.bf16.msra.mxu0 0
      %995 = vmatprep.subr.bf16.mxu0 0
      %996 = vmatpush1.bf16.msra.mxu0 0
      %997 = vmatprep.subr.bf16.mxu0 0
      %998 = vmatpush1.bf16.msra.mxu0 0
      %999 = vmatprep.subr.bf16.mxu0 0
      %1000 = vmatpush1.bf16.msra.mxu0 0
      %1001 = vmatprep.subr.bf16.mxu0 0
      %1002 = vmatpush1.bf16.msra.mxu0 0
      %1003 = vmatprep.subr.bf16.mxu0 0
      %1004 = vmatpush1.bf16.msra.mxu0 0
      %1005 = vmatprep.subr.bf16.mxu0 0
      %1006 = vmatpush1.bf16.msra.mxu0 0
      %1007 = vmatprep.mubr.bf16.mxu0 0
      %1008 = vmatmul.mubr.bf16.gmra.mrb[0].mxu0 %v894
      %v1009 = vpop.f32.mrb[0].mxu0
      %v1010 = vadd.f32 %v925, %v1009
      %v1011 = vpop.f32.mrb[0].mxu0
      %v1012 = vpop.f32.mrb[0].mxu0
      %v1013 = vadd.f32 %v925, %v1012
      %v1014 = vpop.f32.mrb[0].mxu0
      %1015 = vmatprep.mubr.bf16.mxu0 0
      %1016 = vmatmul.mubr.bf16.gmra.mrb[0].mxu0 %v895
      %v1017 = vpop.f32.mrb[0].mxu0
      %v1018 = vadd.f32 %v925, %v1017
      %v1019 = vpop.f32.mrb[0].mxu0
      %v1020 = vpop.f32.mrb[0].mxu0
      %v1021 = vadd.f32 %v925, %v1020
      %v1022 = vpop.f32.mrb[0].mxu0
      %1023 = vmatprep.mubr.bf16.mxu0 0
      %1024 = vmatmul.mubr.bf16.gmra.mrb[0].mxu0 %v896
      %v1025 = vpop.f32.mrb[0].mxu0
      %v1026 = vadd.f32 %v925, %v1025
      %v1027 = vpop.f32.mrb[0].mxu0
      %v1028 = vpop.f32.mrb[0].mxu0
      %v1029 = vadd.f32 %v925, %v1028
      %v1030 = vpop.f32.mrb[0].mxu0
      %1031 = vmatprep.mubr.bf16.mxu0 0
      %1032 = vmatmul.mubr.bf16.gmra.mrb[0].mxu0 %v897
      %v1033 = vpop.f32.mrb[0].mxu0
      %v1034 = vadd.f32 %v925, %v1033
      %v1035 = vpop.f32.mrb[0].mxu0
      %v1036 = vpop.f32.mrb[0].mxu0
      %v1037 = vadd.f32 %v925, %v1036
      %v1038 = vpop.f32.mrb[0].mxu0
      %1039 = vmatprep.mubr.bf16.mxu0 0
      %1040 = vmatmul.mubr.bf16.gmra.mrb[0].mxu0 %v898
      %v1041 = vpop.f32.mrb[0].mxu0
      %v1042 = vadd.f32 %v925, %v1041
      %v1043 = vpop.f32.mrb[0].mxu0
      %v1044 = vpop.f32.mrb[0].mxu0
      %v1045 = vadd.f32 %v925, %v1044
      %v1046 = vpop.f32.mrb[0].mxu0
      %1047 = vmatprep.mubr.bf16.mxu0 0
      %1048 = vmatmul.mubr.bf16.gmra.mrb[0].mxu0 %v899
      %v1049 = vpop.f32.mrb[0].mxu0
      %v1050 = vadd.f32 %v925, %v1049
      %v1051 = vpop.f32.mrb[0].mxu0
      %v1052 = vpop.f32.mrb[0].mxu0
      %v1053 = vadd.f32 %v925, %v1052
      %v1054 = vpop.f32.mrb[0].mxu0
      %1055 = vmatprep.mubr.bf16.mxu0 0
      %1056 = vmatmul.mubr.bf16.gmra.mrb[0].mxu0 %v900
      %v1057 = vpop.f32.mrb[0].mxu0
      %v1058 = vadd.f32 %v925, %v1057
      %v1059 = vpop.f32.mrb[0].mxu0
      %v1060 = vpop.f32.mrb[0].mxu0
      %v1061 = vadd.f32 %v925, %v1060
      %v1062 = vpop.f32.mrb[0].mxu0
      %1063 = vmatprep.mubr.bf16.mxu0 0
      %1064 = vmatmul.mubr.bf16.gmra.mrb[0].mxu0 %v901
      %v1065 = vpop.f32.mrb[0].mxu0
      %v1066 = vadd.f32 %v925, %v1065
      %v1067 = vpop.f32.mrb[0].mxu0
      %v1068 = vpop.f32.mrb[0].mxu0
      %v1069 = vadd.f32 %v925, %v1068
      %v1070 = vpop.f32.mrb[0].mxu0
      %1071 = vdwg.mxu0
      %v1072 = vmax.f32 %v1010, 0.0
      %v1073 = vmax.f32 %v1013, 0.0
      %v1074 = vmax.f32 %v1018, 0.0
      %v1075 = vmax.f32 %v1021, 0.0
      %v1076 = vmax.f32 %v1026, 0.0
      %v1077 = vmax.f32 %v1029, 0.0
      %v1078 = vmax.f32 %v1034, 0.0
      %v1079 = vmax.f32 %v1037, 0.0
      %v1080 = vmax.f32 %v1042, 0.0
      %v1081 = vmax.f32 %v1045, 0.0
      %v1082 = vmax.f32 %v1050, 0.0
      %v1083 = vmax.f32 %v1053, 0.0
      %v1084 = vmax.f32 %v1058, 0.0
      %v1085 = vmax.f32 %v1061, 0.0
      %v1086 = vmax.f32 %v1066, 0.0
      %v1087 = vmax.f32 %v1069, 0.0
      %v1088 = vadd.f32 %v878, %v1072
      %v1089 = vadd.f32 %v879, %v1073
      %v1090 = vadd.f32 %v880, %v1074
      %v1091 = vadd.f32 %v881, %v1075
      %v1092 = vadd.f32 %v882, %v1076
      %v1093 = vadd.f32 %v883, %v1077
      %v1094 = vadd.f32 %v884, %v1078
      %v1095 = vadd.f32 %v885, %v1079
      %v1096 = vadd.f32 %v886, %v1080
      %v1097 = vadd.f32 %v887, %v1081
      %v1098 = vadd.f32 %v888, %v1082
      %v1099 = vadd.f32 %v889, %v1083
      %v1100 = vadd.f32 %v890, %v1084
      %v1101 = vadd.f32 %v891, %v1085
      %v1102 = vadd.f32 %v892, %v1086
      %v1103 = vadd.f32 %v893, %v1087
      %v1104 = vpack.c.bf16 %v1089, %v1088
      %v1105 = vpack.c.bf16 %v1091, %v1090
      %v1106 = vpack.c.bf16 %v1093, %v1092
      %v1107 = vpack.c.bf16 %v1095, %v1094
      %v1108 = vpack.c.bf16 %v1097, %v1096
      %v1109 = vpack.c.bf16 %v1099, %v1098
      %v1110 = vpack.c.bf16 %v1101, %v1100
      %v1111 = vpack.c.bf16 %v1103, %v1102
      %v1112 = vld [vmem:[%s5] sm:$0xf]
      %v1113 = vld [vmem:[%s5 + $0x4] sm:$0xf]
      %v1114 = vld [vmem:[%s5 + $0x8] sm:$0xf]
      %v1115 = vld [vmem:[%s5 + $0xc] sm:$0xf]
      %v1116 = vld [vmem:[%s5 + $0x10] sm:$0xf]
      %v1117 = vld [vmem:[%s5 + $0x14] sm:$0xf]
      %v1118 = vld [vmem:[%s5 + $0x18] sm:$0xf]
      %v1119 = vld [vmem:[%s5 + $0x1c] sm:$0xf]
      %v1120 = vld [vmem:[%s5 + $0x20] sm:$0xf]
      %v1121 = vld [vmem:[%s5 + $0x24] sm:$0xf]
      %v1122 = vld [vmem:[%s5 + $0x28] sm:$0xf]
      %v1123 = vld [vmem:[%s5 + $0x2c] sm:$0xf]
      %v1124 = vld [vmem:[%s5 + $0x30] sm:$0xf]
      %v1125 = vld [vmem:[%s5 + $0x34] sm:$0xf]
      %v1126 = vld [vmem:[%s5 + $0x38] sm:$0xf]
      %v1127 = vld [vmem:[%s5 + $0x3c] sm:$0xf]
      %v1128 = vld [vmem:[%s6] sm:$0x1]
      %v1130 = vlaneseq
      %v1131 = vshrl.u32 %v1130, 7
      %v1132 = vsub.s32 0, %v1131
      %v1133 = vrot.slane %v1128, %v1132
      %v1151 = vunpack.c.l.b16 %v1112
      %v1152 = vunpack.c.l.b16 %v1113
      %v1153 = vunpack.c.l.b16 %v1114
      %v1154 = vunpack.c.l.b16 %v1115
      %v1155 = vunpack.c.l.b16 %v1116
      %v1156 = vunpack.c.l.b16 %v1117
      %v1157 = vunpack.c.l.b16 %v1118
      %v1158 = vunpack.c.l.b16 %v1119
      %v1159 = vunpack.c.l.b16 %v1120
      %v1160 = vunpack.c.l.b16 %v1121
      %v1161 = vunpack.c.l.b16 %v1122
      %v1162 = vunpack.c.l.b16 %v1123
      %v1163 = vunpack.c.l.b16 %v1124
      %v1164 = vunpack.c.l.b16 %v1125
      %v1165 = vunpack.c.l.b16 %v1126
      %v1166 = vunpack.c.l.b16 %v1127
      %v1167 = vpack.c.b16 %v1152, %v1151
      %v1168 = vpack.c.b16 %v1154, %v1153
      %v1169 = vpack.c.b16 %v1156, %v1155
      %v1170 = vpack.c.b16 %v1158, %v1157
      %v1171 = vpack.c.b16 %v1160, %v1159
      %v1172 = vpack.c.b16 %v1162, %v1161
      %v1173 = vpack.c.b16 %v1164, %v1163
      %v1174 = vpack.c.b16 %v1166, %v1165
      %1183 = vmatprep.subr.bf16.mxu0 0
      %1184 = vmatpush1.bf16.msra.mxu0 %v1167
      %1185 = vmatprep.subr.bf16.mxu0 0
      %1186 = vmatpush1.bf16.msra.mxu0 %v1168
      %1187 = vmatprep.subr.bf16.mxu0 0
      %1188 = vmatpush1.bf16.msra.mxu0 %v1169
      %1189 = vmatprep.subr.bf16.mxu0 0
      %1190 = vmatpush1.bf16.msra.mxu0 %v1170
      %1191 = vmatprep.subr.bf16.mxu0 0
      %1192 = vmatpush1.bf16.msra.mxu0 %v1171
      %1193 = vmatprep.subr.bf16.mxu0 0
      %1194 = vmatpush1.bf16.msra.mxu0 %v1172
      %1195 = vmatprep.subr.bf16.mxu0 0
      %1196 = vmatpush1.bf16.msra.mxu0 %v1173
      %1197 = vmatprep.subr.bf16.mxu0 0
      %1198 = vmatpush1.bf16.msra.mxu0 %v1174
      %1199 = vmatprep.subr.bf16.mxu0 0
      %1200 = vmatpush1.bf16.msra.mxu0 0
      %1201 = vmatprep.subr.bf16.mxu0 0
      %1202 = vmatpush1.bf16.msra.mxu0 0
      %1203 = vmatprep.subr.bf16.mxu0 0
      %1204 = vmatpush1.bf16.msra.mxu0 0
      %1205 = vmatprep.subr.bf16.mxu0 0
      %1206 = vmatpush1.bf16.msra.mxu0 0
      %1207 = vmatprep.subr.bf16.mxu0 0
      %1208 = vmatpush1.bf16.msra.mxu0 0
      %1209 = vmatprep.subr.bf16.mxu0 0
      %1210 = vmatpush1.bf16.msra.mxu0 0
      %1211 = vmatprep.subr.bf16.mxu0 0
      %1212 = vmatpush1.bf16.msra.mxu0 0
      %1213 = vmatprep.subr.bf16.mxu0 0
      %1214 = vmatpush1.bf16.msra.mxu0 0
      %1215 = vmatprep.mubr.bf16.mxu0 0
      %1216 = vmatmul.mubr.bf16.gmra.mrb[0].mxu0 %v1104
      %v1217 = vpop.f32.mrb[0].mxu0
      %v1218 = vadd.f32 %v1133, %v1217
      %v1219 = vpop.f32.mrb[0].mxu0
      %v1220 = vpop.f32.mrb[0].mxu0
      %v1221 = vadd.f32 %v1133, %v1220
      %v1222 = vpop.f32.mrb[0].mxu0
      %1223 = vmatprep.mubr.bf16.mxu0 0
      %1224 = vmatmul.mubr.bf16.gmra.mrb[0].mxu0 %v1105
      %v1225 = vpop.f32.mrb[0].mxu0
      %v1226 = vadd.f32 %v1133, %v1225
      %v1227 = vpop.f32.mrb[0].mxu0
      %v1228 = vpop.f32.mrb[0].mxu0
      %v1229 = vadd.f32 %v1133, %v1228
      %v1230 = vpop.f32.mrb[0].mxu0
      %1231 = vmatprep.mubr.bf16.mxu0 0
      %1232 = vmatmul.mubr.bf16.gmra.mrb[0].mxu0 %v1106
      %v1233 = vpop.f32.mrb[0].mxu0
      %v1234 = vadd.f32 %v1133, %v1233
      %v1235 = vpop.f32.mrb[0].mxu0
      %v1236 = vpop.f32.mrb[0].mxu0
      %v1237 = vadd.f32 %v1133, %v1236
      %v1238 = vpop.f32.mrb[0].mxu0
      %1239 = vmatprep.mubr.bf16.mxu0 0
      %1240 = vmatmul.mubr.bf16.gmra.mrb[0].mxu0 %v1107
      %v1241 = vpop.f32.mrb[0].mxu0
      %v1242 = vadd.f32 %v1133, %v1241
      %v1243 = vpop.f32.mrb[0].mxu0
      %v1244 = vpop.f32.mrb[0].mxu0
      %v1245 = vadd.f32 %v1133, %v1244
      %v1246 = vpop.f32.mrb[0].mxu0
      %1247 = vmatprep.mubr.bf16.mxu0 0
      %1248 = vmatmul.mubr.bf16.gmra.mrb[0].mxu0 %v1108
      %v1249 = vpop.f32.mrb[0].mxu0
      %v1250 = vadd.f32 %v1133, %v1249
      %v1251 = vpop.f32.mrb[0].mxu0
      %v1252 = vpop.f32.mrb[0].mxu0
      %v1253 = vadd.f32 %v1133, %v1252
      %v1254 = vpop.f32.mrb[0].mxu0
      %1255 = vmatprep.mubr.bf16.mxu0 0
      %1256 = vmatmul.mubr.bf16.gmra.mrb[0].mxu0 %v1109
      %v1257 = vpop.f32.mrb[0].mxu0
      %v1258 = vadd.f32 %v1133, %v1257
      %v1259 = vpop.f32.mrb[0].mxu0
      %v1260 = vpop.f32.mrb[0].mxu0
      %v1261 = vadd.f32 %v1133, %v1260
      %v1262 = vpop.f32.mrb[0].mxu0
      %1263 = vmatprep.mubr.bf16.mxu0 0
      %1264 = vmatmul.mubr.bf16.gmra.mrb[0].mxu0 %v1110
      %v1265 = vpop.f32.mrb[0].mxu0
      %v1266 = vadd.f32 %v1133, %v1265
      %v1267 = vpop.f32.mrb[0].mxu0
      %v1268 = vpop.f32.mrb[0].mxu0
      %v1269 = vadd.f32 %v1133, %v1268
      %v1270 = vpop.f32.mrb[0].mxu0
      %1271 = vmatprep.mubr.bf16.mxu0 0
      %1272 = vmatmul.mubr.bf16.gmra.mrb[0].mxu0 %v1111
      %v1273 = vpop.f32.mrb[0].mxu0
      %v1274 = vadd.f32 %v1133, %v1273
      %v1275 = vpop.f32.mrb[0].mxu0
      %v1276 = vpop.f32.mrb[0].mxu0
      %v1277 = vadd.f32 %v1133, %v1276
      %v1278 = vpop.f32.mrb[0].mxu0
      %1279 = vdwg.mxu0
      %vm1280 = vcmask 64512
      %1281 = vst.msk [vmem:[%s280] sm:$0xff] %vm1280, %v1218
      %1282 = vst.msk [vmem:[%s280 + $0x8] sm:$0xff] %vm1280, %v1221
      %1283 = vst.msk [vmem:[%s280 + $0x10] sm:$0xff] %vm1280, %v1226
      %1284 = vst.msk [vmem:[%s280 + $0x18] sm:$0xff] %vm1280, %v1229
      %1285 = vst.msk [vmem:[%s280 + $0x20] sm:$0xff] %vm1280, %v1234
      %1286 = vst.msk [vmem:[%s280 + $0x28] sm:$0xff] %vm1280, %v1237
      %1287 = vst.msk [vmem:[%s280 + $0x30] sm:$0xff] %vm1280, %v1242
      %1288 = vst.msk [vmem:[%s280 + $0x38] sm:$0xff] %vm1280, %v1245
      %1289 = vst.msk [vmem:[%s280 + $0x40] sm:$0xff] %vm1280, %v1250
      %1290 = vst.msk [vmem:[%s280 + $0x48] sm:$0xff] %vm1280, %v1253
      %1291 = vst.msk [vmem:[%s280 + $0x50] sm:$0xff] %vm1280, %v1258
      %1292 = vst.msk [vmem:[%s280 + $0x58] sm:$0xff] %vm1280, %v1261
      %1293 = vst.msk [vmem:[%s280 + $0x60] sm:$0xff] %vm1280, %v1266
      %1294 = vst.msk [vmem:[%s280 + $0x68] sm:$0xff] %vm1280, %v1269
      %1295 = vst.msk [vmem:[%s280 + $0x70] sm:$0xff] %vm1280, %v1274
      %1296 = vst.msk [vmem:[%s280 + $0x78] sm:$0xff] %vm1280, %v1277
      %s1297 = smul.u32 16, %s18
      %p1298 = scmp.lt.s32.totalorder %s1297, 31
      %s1299 = scalar_select %p1298, %s1297, 31
      %s1300 = smul.addr %s1299, 8
      %s1301 = scalar_lea.vmem %s7, %s1300
      // Predicated region
      $region49: #{tpu_custom_call.1} parent=47 // pred_check
        %p1302 = pneg %p188
      $region50: #{tpu_custom_call.1} parent=47 // pred_check_branch
        %1304 = sbr.rel (%p1302) target = $region52
      $region51: #{tpu_custom_call.1} parent=47 // pred_region
        %s1305 = smul.u32 16, %s18
      $region52: #{tpu_custom_call.1} parent=47 // pred_fallthru
        _
    $region48: #{tpu_custom_call.1} parent=5 // pred_fallthru
      _
    %p1306 = scmp.le.s32.totalorder 2, %s13
    // Predicated region
    $region53: #{tpu_custom_call.1} parent=5 // pred_check
      %p1307 = pneg %p1306
    $region54: #{tpu_custom_call.1} parent=5 // pred_check_branch
      %1309 = sbr.rel (%p1307) target = $region56
    $region55: #{tpu_custom_call.1} parent=5 // pred_region
      %s1310 = ssub.s32 %s13, 2
      // Predicated region
      $region57: #{tpu_custom_call.1} parent=55 // pred_check
        %p1311 = pneg %p194
      $region58: #{tpu_custom_call.1} parent=55 // pred_check_branch
        %1313 = sbr.rel (%p1311) target = $region60
      $region59: #{tpu_custom_call.1} parent=55 // pred_region
        %s1314 = smul.u32 16, %s19
        %p1315 = scmp.lt.s32.totalorder %s1314, 31
        %s1316 = scalar_select %p1315, %s1314, 31
        %s1317 = smul.addr %s1316, 8
        %s1318 = scalar_lea.vmem %s7, %s1317
      $region60: #{tpu_custom_call.1} parent=55 // pred_fallthru
        _
    $region56: #{tpu_custom_call.1} parent=5 // pred_fallthru
      _
  $region6: #{tpu_custom_call.1} parent=0 // loop_footer
    %s17 = sadd.s32 1, %s13
  $region7: #{tpu_custom_call.1} parent=0 // loop_footer_branch
    %12 = sbr.rel target = $region3
  $region8: #{tpu_custom_call.1} parent=0 // loop_exit
    _

</llo_original>
